<compile_context>
chip_gen: v7x
topology: tpu7x:2x2x1
jax: 0.10.0
libtpu: 0.0.40
codegen_flags: <defaults>
</compile_context>

<pallas_src>
import jax
import jax.numpy as jnp
from jax.experimental import pallas as pl
from jax.experimental.pallas import tpu as pltpu

HIDDEN = 768   # BERT hidden size (fc1 in-features)
MID = 128      # fc1 out-features
OUT = 1        # fc2 out-features
TB_CAP = 2048  # max batch rows per tile (bf16: 2 streams x 2 buffers x 3.1 MiB = 12.6 MiB)


def _round_up(x, m):
    return ((x + m - 1) // m) * m


def _cdiv(a, b):
    return -(-a // b)


def similarity_head_kernel(a_ref, p_ref, v_ref, b2_ref, o_ref):
    """score = sum((a - p) * v, -1) + b2 for one batch tile, entirely in VMEM.

    a_ref, p_ref : [TB, 768]  bf16  pooled CLS embeddings (abstract / paraphrase)
    v_ref        : [1, 768]   f32   folded head weight  v = fc2_w @ fc1_w
    b2_ref       : [1]        f32   fc2 bias (SMEM scalar)
    o_ref        : [1, 1, TB] f32   lane-dense similarity scores for this tile
    """
    # Upcast BEFORE subtracting: the bf16 rounding already happened at the HBM stream,
    # doing the diff in f32 avoids a second rounding of the (possibly small) difference.
    a = a_ref[...].astype(jnp.float32)
    p = p_ref[...].astype(jnp.float32)
    diff = a - p                                   # VPU, f32

    # fc1/fc2 are both linear and fc2 has N=1, so the whole head collapses to a
    # dot-product with the precomputed vector v = fc2_w @ fc1_w:
    #   score = (diff @ W1.T) @ W2.T + b2 = sum(diff * v, -1) + b2
    prod = diff * v_ref[...]                       # VPU multiply, sublane-broadcast of v
    score = jnp.sum(prod, axis=-1) + b2_ref[0]     # XLU lane reduce + scalar bias, (TB,)
    o_ref[0, 0, :] = score.astype(o_ref.dtype)     # lane-dense store


def similarity_head(pooled_abstract, pooled_paraphrase, fc1_w, fc2_w, fc2_b):
    """Glue: pick the batch tile, fold fc2 into fc1, invoke the Pallas kernel."""
    B = pooled_abstract.shape[0]

    # At least 2 tiles whenever possible (v7x megacore), tile rows a multiple of 8,
    # capped so double-buffered bf16 activation blocks stay well inside scoped VMEM.
    TB = min(TB_CAP, _round_up(_cdiv(B, 2), 8))
    if TB >= B:                      # tiny batch: one full-array block (always legal)
        TB = B
    num_tiles = _cdiv(B, TB)         # last block may be partial; tail rows are sliced off

    # bf16 activation streams: the kernel is HBM-bound on these two arrays, halving
    # the bytes moves the roofline ~2x on every generation.  No host-side padding.
    a = pooled_abstract.astype(jnp.bfloat16)
    p = pooled_paraphrase.astype(jnp.bfloat16)

    # Fold fc2 into fc1 in f32 (O(100K) FLOPs, done once by XLA outside the kernel).
    v = fc2_w.astype(jnp.float32) @ fc1_w.astype(jnp.float32)     # [1, 768] f32
    b2 = fc2_b.reshape(1).astype(jnp.float32)                     # [1] -> SMEM

    flops = num_tiles * TB * (3 * HIDDEN)                          # sub + mul + reduce
    bytes_accessed = (2 * B * HIDDEN * 2          # two bf16 activation streams
                      + HIDDEN * 4 + 4            # folded weight vector + bias
                      + num_tiles * TB * 4)       # lane-dense f32 output slab

    out = pl.pallas_call(
        similarity_head_kernel,
        out_shape=jax.ShapeDtypeStruct((num_tiles, 1, TB), jnp.float32),
        grid=(num_tiles,),
        in_specs=[
            pl.BlockSpec((TB, HIDDEN), lambda i: (i, 0)),            # abstract tile
            pl.BlockSpec((TB, HIDDEN), lambda i: (i, 0)),            # paraphrase tile
            pl.BlockSpec((1, HIDDEN), lambda i: (0, 0)),             # folded weight, resident
            pl.BlockSpec(memory_space=pltpu.MemorySpace.SMEM),       # 4-byte bias -> SMEM
        ],
        out_specs=pl.BlockSpec((1, 1, TB), lambda i: (i, 0, 0)),     # lane-dense scores
        compiler_params=pltpu.CompilerParams(
            dimension_semantics=("parallel",)),
        cost_estimate=pl.CostEstimate(
            flops=flops, transcendentals=0, bytes_accessed=bytes_accessed),
    )(a, p, v, b2)

    # Flatten the per-tile lane-dense slabs back to (B, 1); garbage tail rows from the
    # partial last block are dropped here and never feed anything else.
    return out.reshape(num_tiles * TB)[:B].reshape(B, OUT)


# ---------------------------------------------------------------------------
# Synthetic stand-in for the pre-trained BERT encoder (plain JAX glue).
# TODO(synk): the real PreTrainedModel (self.bert) has no clean Pallas equivalent here;
# a deterministic embedding lookup produces last_hidden_state instead.
# ---------------------------------------------------------------------------
def fake_bert_last_hidden_state(input_ids, attention_mask, embed_table):
    hidden = embed_table[input_ids]                     # [B, S, 768]
    return hidden * attention_mask[..., None].astype(hidden.dtype)


def forward(input_ids_abstract, attention_mask_abstract,
            input_ids_paraphrase, attention_mask_paraphrase,
            params):
    embed_table, fc1_w, fc1_b, fc2_w, fc2_b = params
    # fc1_b is carried for module fidelity but cancels exactly in fc1(a) - fc1(p).
    del fc1_b
    h_a = fake_bert_last_hidden_state(input_ids_abstract, attention_mask_abstract, embed_table)
    h_p = fake_bert_last_hidden_state(input_ids_paraphrase, attention_mask_paraphrase, embed_table)
    pooled_a = h_a[:, 0]               # CLS token, [B, 768]
    pooled_p = h_p[:, 0]               # CLS token, [B, 768]
    return similarity_head(pooled_a, pooled_p, fc1_w, fc2_w, fc2_b)


if __name__ == "__main__":
    # B=12 exercises the no-pad path: TB=8, grid=2 tiles, partial last block.
    B, S, VOCAB = 12, 8, 64

    key = jax.random.PRNGKey(0)
    k_emb, k_w1, k_b1, k_w2, k_b2, k_ids_a, k_ids_p = jax.random.split(key, 7)

    # Deterministic parameter init (shapes follow the module's __init__).
    embed_table = jax.random.normal(k_emb, (VOCAB, HIDDEN), jnp.float32) * 0.02
    fc1_w = jax.random.normal(k_w1, (MID, HIDDEN), jnp.float32) * 0.02   # nn.Linear(768,128).weight
    fc1_b = jax.random.normal(k_b1, (MID,), jnp.float32) * 0.02          # nn.Linear(768,128).bias
    fc2_w = jax.random.normal(k_w2, (OUT, MID), jnp.float32) * 0.02      # nn.Linear(128,1).weight
    fc2_b = jax.random.normal(k_b2, (OUT,), jnp.float32) * 0.02          # nn.Linear(128,1).bias
    params = (embed_table, fc1_w, fc1_b, fc2_w, fc2_b)

    input_ids_abstract = jax.random.randint(k_ids_a, (B, S), 0, VOCAB, jnp.int32)
    input_ids_paraphrase = jax.random.randint(k_ids_p, (B, S), 0, VOCAB, jnp.int32)
    attention_mask_abstract = jnp.ones((B, S), jnp.int32)
    attention_mask_paraphrase = jnp.ones((B, S), jnp.int32)

    fwd = jax.jit(forward)
    score = fwd(input_ids_abstract, attention_mask_abstract,
                input_ids_paraphrase, attention_mask_paraphrase, params)
    score = jax.block_until_ready(score)

    # Pure-JAX reference with the exact PyTorch op order (bias added per branch, then
    # subtracted; f32 weights throughout).  The kernel uses the mathematically
    # identical folded form with bf16 activation streams, so compare with a modest
    # tolerance.
    def ref():
        h_a = fake_bert_last_hidden_state(input_ids_abstract, attention_mask_abstract, embed_table)[:, 0]
        h_p = fake_bert_last_hidden_state(input_ids_paraphrase, attention_mask_paraphrase, embed_table)[:, 0]
        xa = h_a @ fc1_w.T + fc1_b
        xp = h_p @ fc1_w.T + fc1_b
        return (xa - xp) @ fc2_w.T + fc2_b

    assert score.shape == (B, OUT)
    assert jnp.allclose(score, ref(), atol=1e-3, rtol=1e-2)
    print("KERNEL_OK")
</pallas_src>

<mosaic_0001>
module attributes {stable_mosaic.version = 11 : i64} {
  func.func @similarity_head_kernel(%arg0: i32, %arg1: memref<8x768xbf16, #tpu.memory_space<vmem>>, %arg2: memref<8x768xbf16, #tpu.memory_space<vmem>>, %arg3: memref<1x768xf32, #tpu.memory_space<vmem>>, %arg4: memref<1xf32, #tpu.memory_space<smem>>, %arg5: memref<1x1x8xf32, #tpu.memory_space<vmem>>) attributes {dimension_semantics = [#tpu.dimension_semantics<parallel>], iteration_bounds = array<i64: 2>, scalar_prefetch = 0 : i64, scratch_operands = 0 : i64, tpu.core_type = #tpu.core_type<tc>, window_params = [{transform_indices = @transform_0, window_bounds = array<i64: 8, 768>}, {transform_indices = @transform_1, window_bounds = array<i64: 8, 768>}, {pipeline_mode = #tpu.pipeline_mode<synchronous>, transform_indices = @transform_2, window_bounds = array<i64: 1, 768>}, {transform_indices = @transform_3, window_bounds = array<i64: 1>}, {transform_indices = @transform_4, window_bounds = array<i64: 1, 1, 8>}]} {
    %c0 = arith.constant 0 : index
    %c0_0 = arith.constant 0 : index
    %0 = vector.load %arg1[%c0, %c0_0] : memref<8x768xbf16, #tpu.memory_space<vmem>>, vector<8x768xbf16>
    %1 = arith.extf %0 : vector<8x768xbf16> to vector<8x768xf32>
    %c0_1 = arith.constant 0 : index
    %c0_2 = arith.constant 0 : index
    %2 = vector.load %arg2[%c0_1, %c0_2] : memref<8x768xbf16, #tpu.memory_space<vmem>>, vector<8x768xbf16>
    %3 = arith.extf %2 : vector<8x768xbf16> to vector<8x768xf32>
    %4 = arith.subf %1, %3 : vector<8x768xf32>
    %c0_3 = arith.constant 0 : index
    %c0_4 = arith.constant 0 : index
    %5 = vector.load %arg3[%c0_3, %c0_4] : memref<1x768xf32, #tpu.memory_space<vmem>>, vector<1x768xf32>
    %6 = vector.broadcast %5 : vector<1x768xf32> to vector<8x768xf32>
    %7 = arith.mulf %4, %6 : vector<8x768xf32>
    %cst = arith.constant dense<0.000000e+00> : vector<8xf32>
    %8 = vector.multi_reduction <add>, %7, %cst [1] : vector<8x768xf32> to vector<8xf32>
    %c0_5 = arith.constant 0 : index
    %9 = memref.load %arg4[%c0_5] : memref<1xf32, #tpu.memory_space<smem>>
    %10 = vector.broadcast %9 : f32 to vector<8xf32>
    %11 = arith.addf %8, %10 : vector<8xf32>
    %c0_6 = arith.constant 0 : index
    %c0_7 = arith.constant 0 : index
    %c0_8 = arith.constant 0 : index
    %12 = vector.load %arg5[%c0_6, %c0_7, %c0_8] : memref<1x1x8xf32, #tpu.memory_space<vmem>>, vector<1x1x8xf32>
    %13 = vector.shape_cast %12 : vector<1x1x8xf32> to vector<8xf32>
    %14 = vector.shape_cast %11 : vector<8xf32> to vector<1x1x8xf32>
    tpu.vector_store %arg5[%c0_6, %c0_7, %c0_8], %14 {strides = array<i32>} : memref<1x1x8xf32, #tpu.memory_space<vmem>>, vector<1x1x8xf32>,
    return
  }
  func.func @transform_0(%arg0: i32) -> (i32, i32) {
    %c0_i32 = arith.constant 0 : i32
    %c0_i32_0 = arith.constant 0 : i32
    return %arg0, %c0_i32 : i32, i32
  }
  func.func @transform_1(%arg0: i32) -> (i32, i32) {
    %c0_i32 = arith.constant 0 : i32
    %c0_i32_0 = arith.constant 0 : i32
    return %arg0, %c0_i32 : i32, i32
  }
  func.func @transform_2(%arg0: i32) -> (i32, i32) {
    %c0_i32 = arith.constant 0 : i32
    %c0_i32_0 = arith.constant 0 : i32
    %c0_i32_1 = arith.constant 0 : i32
    return %c0_i32, %c0_i32_0 : i32, i32
  }
  func.func @transform_3(%arg0: i32) -> i32 {
    %c0_i32 = arith.constant 0 : i32
    %c0_i32_0 = arith.constant 0 : i32
    return %c0_i32 : i32
  }
  func.func @transform_4(%arg0: i32) -> (i32, i32, i32) {
    %c0_i32 = arith.constant 0 : i32
    %c0_i32_0 = arith.constant 0 : i32
    %c0_i32_1 = arith.constant 0 : i32
    return %arg0, %c0_i32, %c0_i32_0 : i32, i32, i32
  }
}

</mosaic_0001>

<llo_original>
// kernel: forward.1
$region0: #{forward.1}
  #allocation0 [shape = 'u32[]', space=smem, size = 0x4, offset = 0x4, fixed_abs, tag = 'smem constant byte address 0x4 - core index']
  #allocation1 [shape = 'u32[144,128]{1,0:T(1,128)}', space=vmem, size = 0x12000, scoped, tag = 'internal scratch']
  #allocation2 [shape = 'f32[1]{0:T(128)S(6)}', space=smem, size = 0x200, scoped, tag = 'scoped memory for forward.1']
  %s0 = inlined_call_operand.vmem [shape: bf16[12,768], index: 0, kind: input, shape index: {}]
  %s1 = inlined_call_operand.vmem [shape: bf16[12,768], index: 1, kind: input, shape index: {}]
  %s2 = inlined_call_operand.vmem [shape: f32[1,768], index: 2, kind: input, shape index: {}]
  %s3 = inlined_call_operand.<no memory space> [shape: f32[1], index: 3, kind: input, shape index: {}]
  %s4 = inlined_call_operand.vmem [shape: f32[2,1,8], index: 4, kind: output, shape index: {}]
  %s5 = sld [smem:[#allocation0]]
  $region49: #{forward.1} parent=0
    _
  %s7 = ssub.s32 1, %s5
  %s8 = scalar_select 0, %s7, %s5
  %9 = sst [smem:[#allocation2]] %s3
  loop: start=0, step=1, limit=4
  $region2: #{forward.1} parent=0 // loop_pre_header
    _
  $region3: #{forward.1} parent=0 // loop_header
    %s11 = sphi 0, %s15
    %p12 = scmp.ge.s32.totalorder %s11, 4
    %s21 = sphi 0, %s23
    %s24 = sphi 0, %s21
    %s25 = sphi 0, %s24
    %s41 = sphi 0, %s25
    %s47 = sphi 0, %s49
    %s50 = sphi 0, %s47
    %s51 = sphi 0, %s50
    %s67 = sphi 0, %s51
    %s71 = sphi 0, %s71
    %s73 = sphi 0, %s71
    %s74 = sphi 0, %s73
    %s88 = sphi 0, %s74
    %s92 = sphi 0, %s92
    %s94 = sphi 0, %s92
    %s95 = sphi 0, %s94
    %s109 = sphi 0, %s95
    %s115 = sphi 0, %s117
    %s118 = sphi 0, %s115
    %s119 = sphi 0, %s118
    %s135 = sphi 0, %s119
  $region4: #{forward.1} parent=0 // loop_header_branch
    %14 = sbr.rel (%p12) target = $region8
  $region5: #{forward.1} parent=0 // loop_body
    %s16 = ssub.s32 %s11, 1
    %s17 = ssub.s32 %s11, 2
    %s18 = sadd.s32 %s11, 1
    %s19 = ssub.s32 %s11, %s18
    %p20 = scmp.eq.s32.totalorder %s19, 0
    %s22 = sadd.s32 %s21, 1
    %s23 = scalar_select %p20, %s21, %s22
    %p26 = pneg %p20
    %p27 = scmp.eq.s32.totalorder %s11, 1
    %p28 = por %p26, %p27
    %p29 = scmp.ne.s32.totalorder %s21, %s24
    %p30 = scmp.eq.s32.totalorder %s11, 0
    %p31 = por %p29, %p30
    %p32 = scmp.ne.s32.totalorder %s21, %s24
    %p33 = scmp.eq.s32.totalorder %s16, 1
    %p34 = por %p32, %p33
    %p35 = scmp.ne.s32.totalorder %s24, %s25
    %p36 = scmp.eq.s32.totalorder %s16, 0
    %p37 = por %p35, %p36
    %p38 = scmp.ne.s32.totalorder %s24, %s25
    %p39 = scmp.eq.s32.totalorder %s17, 1
    %p40 = por %p38, %p39
    %p42 = scmp.ne.s32.totalorder %s25, %s41
    %p43 = scmp.eq.s32.totalorder %s17, 0
    %p44 = por %p42, %p43
    %s45 = ssub.s32 %s11, %s18
    %p46 = scmp.eq.s32.totalorder %s45, 0
    %s48 = sadd.s32 %s47, 1
    %s49 = scalar_select %p46, %s47, %s48
    %p52 = pneg %p46
    %p53 = scmp.eq.s32.totalorder %s11, 1
    %p54 = por %p52, %p53
    %p55 = scmp.ne.s32.totalorder %s47, %s50
    %p56 = scmp.eq.s32.totalorder %s11, 0
    %p57 = por %p55, %p56
    %p58 = scmp.ne.s32.totalorder %s47, %s50
    %p59 = scmp.eq.s32.totalorder %s16, 1
    %p60 = por %p58, %p59
    %p61 = scmp.ne.s32.totalorder %s50, %s51
    %p62 = scmp.eq.s32.totalorder %s16, 0
    %p63 = por %p61, %p62
    %p64 = scmp.ne.s32.totalorder %s50, %s51
    %p65 = scmp.eq.s32.totalorder %s17, 1
    %p66 = por %p64, %p65
    %p68 = scmp.ne.s32.totalorder %s51, %s67
    %p69 = scmp.eq.s32.totalorder %s17, 0
    %p70 = por %p68, %p69
    %s72 = sadd.s32 %s71, 1
    %p75 = scmp.eq.s32.totalorder %s11, 1
    %p76 = scmp.ne.s32.totalorder %s71, %s73
    %p77 = scmp.eq.s32.totalorder %s11, 0
    %p78 = por %p76, %p77
    %p79 = scmp.ne.s32.totalorder %s71, %s73
    %p80 = scmp.eq.s32.totalorder %s16, 1
    %p81 = por %p79, %p80
    %p82 = scmp.ne.s32.totalorder %s73, %s74
    %p83 = scmp.eq.s32.totalorder %s16, 0
    %p84 = por %p82, %p83
    %p85 = scmp.ne.s32.totalorder %s73, %s74
    %p86 = scmp.eq.s32.totalorder %s17, 1
    %p87 = por %p85, %p86
    %p89 = scmp.ne.s32.totalorder %s74, %s88
    %p90 = scmp.eq.s32.totalorder %s17, 0
    %p91 = por %p89, %p90
    %s93 = sadd.s32 %s92, 1
    %p96 = scmp.eq.s32.totalorder %s11, 1
    %p97 = scmp.ne.s32.totalorder %s92, %s94
    %p98 = scmp.eq.s32.totalorder %s11, 0
    %p99 = por %p97, %p98
    %p100 = scmp.ne.s32.totalorder %s92, %s94
    %p101 = scmp.eq.s32.totalorder %s16, 1
    %p102 = por %p100, %p101
    %p103 = scmp.ne.s32.totalorder %s94, %s95
    %p104 = scmp.eq.s32.totalorder %s16, 0
    %p105 = por %p103, %p104
    %p106 = scmp.ne.s32.totalorder %s94, %s95
    %p107 = scmp.eq.s32.totalorder %s17, 1
    %p108 = por %p106, %p107
    %p110 = scmp.ne.s32.totalorder %s95, %s109
    %p111 = scmp.eq.s32.totalorder %s17, 0
    %p112 = por %p110, %p111
    %s113 = ssub.s32 %s11, %s18
    %p114 = scmp.eq.s32.totalorder %s113, 0
    %s116 = sadd.s32 %s115, 1
    %s117 = scalar_select %p114, %s115, %s116
    %p120 = pneg %p114
    %p121 = scmp.eq.s32.totalorder %s11, 1
    %p122 = por %p120, %p121
    %p123 = scmp.ne.s32.totalorder %s115, %s118
    %p124 = scmp.eq.s32.totalorder %s11, 0
    %p125 = por %p123, %p124
    %p126 = scmp.ne.s32.totalorder %s115, %s118
    %p127 = scmp.eq.s32.totalorder %s16, 1
    %p128 = por %p126, %p127
    %p129 = scmp.ne.s32.totalorder %s118, %s119
    %p130 = scmp.eq.s32.totalorder %s16, 0
    %p131 = por %p129, %p130
    %p132 = scmp.ne.s32.totalorder %s118, %s119
    %p133 = scmp.eq.s32.totalorder %s17, 1
    %p134 = por %p132, %p133
    %p136 = scmp.ne.s32.totalorder %s119, %s135
    %p137 = scmp.eq.s32.totalorder %s17, 0
    %p138 = por %p136, %p137
    %p139 = scmp.le.s32.totalorder 1, %s11
    %p140 = scmp.lt.s32.totalorder %s11, 3
    %p141 = pnand %p139, %p140
    %p142 = pneg %p141
    // Predicated region
    $region9: #{forward.1} parent=5 // pred_check
      _
    $region10: #{forward.1} parent=5 // pred_check_branch
      %144 = sbr.rel (%p141) target = $region12
    $region11: #{forward.1} parent=5 // pred_region
      %s145 = ssub.s32 %s11, 1
      // Predicated region
      $region13: #{forward.1} parent=11 // pred_check
        %p146 = pneg %p84
      $region14: #{forward.1} parent=11 // pred_check_branch
        %148 = sbr.rel (%p146) target = $region16
      $region15: #{forward.1} parent=11 // pred_region
        _
      $region16: #{forward.1} parent=11 // pred_fallthru
        _
      // Predicated region
      $region17: #{forward.1} parent=11 // pred_check
        %p149 = pneg %p105
      $region18: #{forward.1} parent=11 // pred_check_branch
        %151 = sbr.rel (%p149) target = $region20
      $region19: #{forward.1} parent=11 // pred_region
        _
      $region20: #{forward.1} parent=11 // pred_fallthru
        _
    $region12: #{forward.1} parent=5 // pred_fallthru
      _
    %p152 = scmp.lt.s32.totalorder %s11, 2
    // Predicated region
    $region21: #{forward.1} parent=5 // pred_check
      %p153 = pneg %p152
    $region22: #{forward.1} parent=5 // pred_check_branch
      %155 = sbr.rel (%p153) target = $region24
    $region23: #{forward.1} parent=5 // pred_region
      // Predicated region
      $region25: #{forward.1} parent=23 // pred_check
        %p156 = pneg %p31
      $region26: #{forward.1} parent=23 // pred_check_branch
        %158 = sbr.rel (%p156) target = $region28
      $region27: #{forward.1} parent=23 // pred_region
        %p159 = scmp.lt.s32.totalorder %s11, 1
        %s160 = scalar_select %p159, %s11, 1
        %s161 = smul.addr %s160, 6
        %s162 = smul.addr %s161, 4
        %s163 = scalar_lea.vmem %s0, %s162
      $region28: #{forward.1} parent=23 // pred_fallthru
        _
      // Predicated region
      $region29: #{forward.1} parent=23 // pred_check
        %p164 = pneg %p57
      $region30: #{forward.1} parent=23 // pred_check_branch
        %166 = sbr.rel (%p164) target = $region32
      $region31: #{forward.1} parent=23 // pred_region
        %p167 = scmp.lt.s32.totalorder %s11, 1
        %s168 = scalar_select %p167, %s11, 1
        %s169 = smul.addr %s168, 6
        %s170 = smul.addr %s169, 4
        %s171 = scalar_lea.vmem %s1, %s170
      $region32: #{forward.1} parent=23 // pred_fallthru
        _
    $region24: #{forward.1} parent=5 // pred_fallthru
      _
    %p172 = scmp.le.s32.totalorder 1, %s11
    %p173 = scmp.lt.s32.totalorder %s11, 3
    %p174 = pnand %p172, %p173
    %p175 = pneg %p174
    // Predicated region
    $region33: #{forward.1} parent=5 // pred_check
      _
    $region34: #{forward.1} parent=5 // pred_check_branch
      %177 = sbr.rel (%p174) target = $region36
    $region35: #{forward.1} parent=5 // pred_region
      %s178 = ssub.s32 %s11, 1
      %p179 = scmp.lt.s32.totalorder %s16, 1
      %s180 = scalar_select %p179, %s16, 1
      %s181 = smul.addr %s180, 6
      %s182 = smul.addr %s181, 4
      %s183 = scalar_lea.vmem %s0, %s182
      %p184 = pneg %p37
      %p185 = pneg %p34
      %p186 = scmp.lt.s32.totalorder %s16, 1
      %s187 = scalar_select %p186, %s16, 1
      %s188 = smul.addr %s187, 6
      %s189 = smul.addr %s188, 4
      %s190 = scalar_lea.vmem %s1, %s189
      %p191 = pneg %p63
      %p192 = pneg %p60
      %p193 = pneg %p84
      %p194 = pneg %p81
      %p195 = pneg %p105
      %p196 = pneg %p102
      %p197 = pneg %p131
      %p198 = pneg %p128
      %p199 = scmp.lt.s32.totalorder %s16, 1
      %s200 = scalar_select %p199, %s16, 1
      %s201 = scalar_lea.vmem %s4, %s200
      %p202 = scmp.lt.s32.totalorder %s16, 1
      %s203 = scalar_select %p202, %s16, 1
      %s204 = smul.addr %s203, 6
      %s205 = smul.addr %s204, 4
      %s206 = scalar_lea.vmem %s0, %s205
      %p207 = scmp.lt.s32.totalorder %s16, 1
      %s208 = scalar_select %p207, %s16, 1
      %s209 = smul.addr %s208, 6
      %s210 = smul.addr %s209, 4
      %s211 = scalar_lea.vmem %s1, %s210
      %p212 = scmp.lt.s32.totalorder %s16, 1
      %s213 = scalar_select %p212, %s16, 1
      %s214 = scalar_lea.vmem %s4, %s213
      %v215 = vld [vmem:[%s206] sm:$0xff]
      %v216 = vld [vmem:[%s206 + $0x8] sm:$0xff]
      %v217 = vld [vmem:[%s206 + $0x10] sm:$0xff]
      %v218 = vunpack.c.l.bf16 %v215
      %v219 = vunpack.c.h.bf16 %v215
      %v220 = vunpack.c.l.bf16 %v216
      %v221 = vunpack.c.h.bf16 %v216
      %v222 = vunpack.c.l.bf16 %v217
      %v223 = vunpack.c.h.bf16 %v217
      %v224 = vld [vmem:[%s211] sm:$0xff]
      %v225 = vld [vmem:[%s211 + $0x8] sm:$0xff]
      %v226 = vld [vmem:[%s211 + $0x10] sm:$0xff]
      %v227 = vunpack.c.l.bf16 %v224
      %v228 = vunpack.c.h.bf16 %v224
      %v229 = vunpack.c.l.bf16 %v225
      %v230 = vunpack.c.h.bf16 %v225
      %v231 = vunpack.c.l.bf16 %v226
      %v232 = vunpack.c.h.bf16 %v226
      %v233 = vsub.f32 %v218, %v227
      %v234 = vsub.f32 %v219, %v228
      %v235 = vsub.f32 %v220, %v229
      %v236 = vsub.f32 %v221, %v230
      %v237 = vsub.f32 %v222, %v231
      %v238 = vsub.f32 %v223, %v232
      %v239 = vld [vmem:[%s2] sm:$0x3f]
      %v241 = vlaneseq
      %v242 = vshrl.u32 %v241, 7
      %v243 = vsub.s32 0, %v242
      %v244 = vrot.slane %v239, %v243
      %v245 = vlaneseq
      %v246 = vshrl.u32 %v245, 7
      %v247 = vsub.s32 1, %v246
      %v248 = vrot.slane %v239, %v247
      %v249 = vlaneseq
      %v250 = vshrl.u32 %v249, 7
      %v251 = vsub.s32 2, %v250
      %v252 = vrot.slane %v239, %v251
      %v253 = vlaneseq
      %v254 = vshrl.u32 %v253, 7
      %v255 = vsub.s32 3, %v254
      %v256 = vrot.slane %v239, %v255
      %v257 = vlaneseq
      %v258 = vshrl.u32 %v257, 7
      %v259 = vsub.s32 4, %v258
      %v260 = vrot.slane %v239, %v259
      %v261 = vlaneseq
      %v262 = vshrl.u32 %v261, 7
      %v263 = vsub.s32 5, %v262
      %v264 = vrot.slane %v239, %v263
      %v271 = vmul.f32 %v233, %v244
      %v272 = vmul.f32 %v234, %v248
      %v273 = vmul.f32 %v235, %v252
      %v274 = vmul.f32 %v236, %v256
      %v275 = vmul.f32 %v237, %v260
      %v276 = vmul.f32 %v238, %v264
      %v277 = vadd.f32 %v271, %v272
      %v278 = vadd.f32 %v277, %v273
      %v279 = vadd.f32 %v278, %v274
      %v280 = vadd.f32 %v279, %v275
      %v281 = vadd.f32 %v280, %v276
      %282 = vadd.xlane.f32.xlu0 %v281
      %v283 = vpop.xlane.xlu0 %282
      %s284 = sld [smem:[#allocation2]]
      %v285 = vstv %s284
      %v286 = vadd.f32 %v283, %v285
      %v288 = vlaneseq
      %v289 = vand.u32 %v288, 127
      %v290 = vlaneseq
      %v291 = vshrl.u32 %v290, 7
      %v292 = vsub.s32 %v289, %v291
      %v293 = vrot.slane %v286, %v292
      %vm295 = vcmask 57344
      %296 = vst.msk [vmem:[%s214] sm:$0x1] %vm295, %v293
      %p297 = scmp.lt.s32.totalorder %s16, 1
      %s298 = scalar_select %p297, %s16, 1
      %s299 = scalar_lea.vmem %s4, %s298
      // Predicated region
      $region37: #{forward.1} parent=35 // pred_check
        %p300 = pneg %p128
      $region38: #{forward.1} parent=35 // pred_check_branch
        %302 = sbr.rel (%p300) target = $region40
      $region39: #{forward.1} parent=35 // pred_region
        _
      $region40: #{forward.1} parent=35 // pred_fallthru
        _
    $region36: #{forward.1} parent=5 // pred_fallthru
      _
    %p303 = scmp.le.s32.totalorder 2, %s11
    // Predicated region
    $region41: #{forward.1} parent=5 // pred_check
      %p304 = pneg %p303
    $region42: #{forward.1} parent=5 // pred_check_branch
      %306 = sbr.rel (%p304) target = $region44
    $region43: #{forward.1} parent=5 // pred_region
      %s307 = ssub.s32 %s11, 2
      // Predicated region
      $region45: #{forward.1} parent=43 // pred_check
        %p308 = pneg %p134
      $region46: #{forward.1} parent=43 // pred_check_branch
        %310 = sbr.rel (%p308) target = $region48
      $region47: #{forward.1} parent=43 // pred_region
        %p311 = scmp.lt.s32.totalorder %s17, 1
        %s312 = scalar_select %p311, %s17, 1
        %s313 = scalar_lea.vmem %s4, %s312
      $region48: #{forward.1} parent=43 // pred_fallthru
        _
    $region44: #{forward.1} parent=5 // pred_fallthru
      _
  $region6: #{forward.1} parent=0 // loop_footer
    %s15 = sadd.s32 1, %s11
  $region7: #{forward.1} parent=0 // loop_footer_branch
    %10 = sbr.rel target = $region3
  $region8: #{forward.1} parent=0 // loop_exit
    _

</llo_original>
